<compile_context>
chip_gen: v7x
topology: tpu7x:2x2x1
jax: 0.10.0
libtpu: 0.0.40
codegen_flags: <defaults>
</compile_context>

<pallas_src>
import jax
import jax.numpy as jnp
from jax.experimental import pallas as pl
from jax.experimental.pallas import tpu as pltpu

# ----------------------------- hyper-params (match module defaults) ---------
NUM_CLASSES = 7
BALANCE = (4.0, 1.0, 0.4)
BOX_WEIGHT = 0.05
CLS_WEIGHT = 0.5
OBJ_WEIGHT = 1.0
ANCHORS = jnp.array(
    [[[10.0, 13.0], [16.0, 30.0], [33.0, 23.0]],
     [[30.0, 61.0], [62.0, 45.0], [59.0, 119.0]],
     [[116.0, 90.0], [156.0, 198.0], [373.0, 326.0]]], jnp.float32)
NA = 3   # anchors per level
NL = 3   # number of levels

MAX_BLOCK_ROWS = 1024   # (1024,128) f32 block = 512 KiB; 2x double-buffered ~1 MiB VMEM
PAD_LOGIT = -1.0e4      # finite (NOT -inf): softplus(-1e4) == 0.0 exactly in f32/bf16


# ----------------------------- Pallas kernel (obj BCE vs. zero target) ------
def _obj_softplus_sum_kernel(x_ref, out_ref):
    """One (block_rows, 128) block of BCE-with-logits against an all-zero
    target, i.e. softplus(x), folded into a lane-dense (8, 128) partial sum.
    The padded tail was filled with PAD_LOGIT so it contributes exactly 0."""
    x = x_ref[...].astype(jnp.float32)
    # numerically-stable BCE(x, 0) = softplus(x) = max(x,0) + log1p(exp(-|x|))
    loss = jnp.maximum(x, 0.0) + jnp.log1p(jnp.exp(-jnp.abs(x)))
    # Fold sublanes onto 8 with static 8-row slice adds: pure vreg-wise VALU
    # adds, no reshape, no per-step scalar reduction / narrow store.
    rows = loss.shape[0]
    acc = loss[0:8, :]
    for r in range(8, rows, 8):
        acc = acc + loss[r:r + 8, :]
    out_ref[...] = acc


def _obj_softplus_partial_sums(x2d, block_rows):
    """x2d: (rows, 128) with rows % block_rows == 0 (pred dtype, padded with
    PAD_LOGIT).  Returns (8, num_blocks*128) f32 of per-block partial sums."""
    rows = x2d.shape[0]
    nb = rows // block_rows
    return pl.pallas_call(
        _obj_softplus_sum_kernel,
        out_shape=jax.ShapeDtypeStruct((8, nb * 128), jnp.float32),
        grid=(nb,),
        in_specs=[pl.BlockSpec((block_rows, 128), lambda i: (i, 0))],
        out_specs=pl.BlockSpec((8, 128), lambda i: (0, i)),
        compiler_params=pltpu.CompilerParams(
            dimension_semantics=("parallel",)),   # independent blocks -> v7x 2-TC
    )(x2d)


# ----------------------------- plain-JAX helpers (tiny work) -----------------
def _round_up(n, m):
    return ((n + m - 1) // m) * m


def _stable_bce(x, y):
    return jnp.maximum(x, 0.0) - x * y + jnp.log1p(jnp.exp(-jnp.abs(x)))


def _box_iou(b1, b2):
    """b1, b2: (N, 4) in (cx, cy, w, h); returns (N,) IoU (matches reference)."""
    b1x1, b1x2 = b1[:, 0] - b1[:, 2] * 0.5, b1[:, 0] + b1[:, 2] * 0.5
    b1y1, b1y2 = b1[:, 1] - b1[:, 3] * 0.5, b1[:, 1] + b1[:, 3] * 0.5
    b2x1, b2x2 = b2[:, 0] - b2[:, 2] * 0.5, b2[:, 0] + b2[:, 2] * 0.5
    b2y1, b2y2 = b2[:, 1] - b2[:, 3] * 0.5, b2[:, 1] + b2[:, 3] * 0.5
    xi1 = jnp.maximum(b1x1, b2x1)
    yi1 = jnp.maximum(b1y1, b2y1)
    xi2 = jnp.minimum(b1x2, b2x2)
    yi2 = jnp.minimum(b1y2, b2y2)
    inter = jnp.maximum(xi2 - xi1, 0.0) * jnp.maximum(yi2 - yi1, 0.0)
    a1 = (b1x2 - b1x1) * (b1y2 - b1y1)
    a2 = (b2x2 - b2x1) * (b2y2 - b2y1)
    return inter / (a1 + a2 - inter + 1e-7)


def _build_targets(targets, anchors_l, grid_h, grid_w, num_classes):
    """Mirror of YOLOLoss._build_targets for a [Nt, 6] target tensor that was
    standardized to batch dim 1 (batch_idx == 0).  Invalid targets are kept
    (static shapes) but masked out; index math is done on sanitized values."""
    cls_raw = targets[:, 0]
    valid = (jnp.all(jnp.isfinite(targets), axis=1)
             & jnp.all(targets[:, 1:5] > 0, axis=1)
             & (cls_raw >= 0) & (cls_raw < num_classes))

    t_safe = jnp.nan_to_num(targets, nan=0.0, posinf=0.0, neginf=0.0)
    gxy = t_safe[:, 1:3]
    gwh = jnp.where(valid[:, None], t_safe[:, 3:5], 1.0)   # keep ratios finite

    # anchor assignment (na > 1 branch of the reference)
    ratio = gwh[:, None, :] / anchors_l[None, :, :]          # (Nt, na, 2)
    r = jnp.min(jnp.minimum(ratio, 1.0 / ratio), axis=2)     # (Nt, na)
    anchor_idx = jnp.argmax(r, axis=1).astype(jnp.int32)

    gxy_int = gxy.astype(jnp.int32)                          # trunc, like .long()
    gxi = jnp.clip(gxy_int[:, 0], 0, grid_w - 1)
    gyi = jnp.clip(gxy_int[:, 1], 0, grid_h - 1)
    box_target = jnp.concatenate([gxy - gxy_int.astype(jnp.float32), gwh], axis=1)
    batch_idx = jnp.zeros_like(anchor_idx)
    return {
        "batch_idx": batch_idx, "anchor_idx": anchor_idx,
        "grid_y": gyi, "grid_x": gxi,
        "box_target": box_target, "cls_target": t_safe[:, 0],
        "valid": valid,
    }


# ----------------------------- loss -------------------------------------------
@jax.jit
def yolo_loss(predictions, targets):
    """predictions: tuple of 3 arrays (B, na*(5+nc), H, W); targets: (Nt, 6).
    Returns (total_loss, {'box_loss','obj_loss','cls_loss'})."""
    nc = NUM_CLASSES
    obj_dtype = predictions[0].dtype
    sub = 16 if jnp.dtype(obj_dtype).itemsize < 4 else 8   # sublane tile

    # pick a block size: cap at MAX_BLOCK_ROWS, don't over-pad tiny grids, and
    # aim for >= 2 blocks on the largest level so the fused grid is >= ~4
    # (keeps both v7x TensorCores busy on the 'parallel' axis).
    level_sizes = [p.shape[0] * NA * p.shape[2] * p.shape[3] for p in predictions]
    max_rows = max(_round_up(n, 128) // 128 for n in level_sizes)
    target_rows = _round_up(-(-max_rows // 2), sub)
    block_rows = max(sub, min(MAX_BLOCK_ROWS, target_rows))
    block_elems = block_rows * 128

    box_losses, cls_losses, has_t = [], [], []
    obj_x, obj_corr, segments = [], [], []
    blk_start = 0

    for i, pred in enumerate(predictions):
        B, _, H, W = pred.shape
        # (B, na*(5+nc), H, W) -> (B, na, 5+nc, H, W); NO channels-last transpose
        p5 = pred.reshape(B, NA, 5 + nc, H, W)

        t = _build_targets(targets, ANCHORS[i], H, W, nc)
        valid = t["valid"]
        n_valid = jnp.sum(valid.astype(jnp.float32))
        denom = jnp.maximum(n_valid, 1.0)

        # gather (Nt, 5+nc) prediction rows straight from the NCHW view
        pg = jax.vmap(lambda b, a, gy, gx, p=p5: p[b, a, :, gy, gx])(
            t["batch_idx"], t["anchor_idx"], t["grid_y"], t["grid_x"])
        pg = pg.astype(jnp.float32)

        # ---------------- box loss: mean(1 - IoU) over valid targets ----------
        iou = _box_iou(pg[:, :4], t["box_target"])
        box_losses.append(jnp.sum(jnp.where(valid, 1.0 - iou, 0.0)) / denom)

        # ---------------- cls loss: BCEWithLogits mean over valid x nc --------
        tcls = jax.nn.one_hot(
            jnp.clip(t["cls_target"], 0, nc - 1).astype(jnp.int32), nc,
            dtype=jnp.float32)                                # label_smoothing=0
        bce = _stable_bce(pg[:, 5:], tcls)
        cls_losses.append(jnp.sum(jnp.where(valid[:, None], bce, 0.0)) / (denom * nc))

        has_t.append((n_valid > 0).astype(jnp.float32))

        # ---------------- obj loss: kernel sum of softplus(x) over all cells,
        # plus an Nt-sized correction here:  BCE(x,1) - BCE(x,0) = -x  for each
        # UNIQUE assigned (b, a, gy, gx) cell (dedup reproduces the scatter
        # "set to 1" semantics exactly).
        keys = ((t["batch_idx"] * NA + t["anchor_idx"]) * H
                + t["grid_y"]) * W + t["grid_x"]
        nt = keys.shape[0]
        order = jnp.arange(nt)
        same_earlier = ((keys[:, None] == keys[None, :])
                        & valid[None, :]
                        & (order[None, :] < order[:, None]))
        unique = valid & ~jnp.any(same_earlier, axis=1)
        obj_corr.append(jnp.sum(jnp.where(unique, pg[:, 4], 0.0)))

        pobj = p5[:, :, 4]                                    # (B, na, H, W) slice
        n = B * NA * H * W
        nb = -(-n // block_elems)
        pad = nb * block_elems - n
        obj_x.append(jnp.pad(pobj.reshape(-1), (0, pad),
                             constant_values=PAD_LOGIT).astype(obj_dtype))
        segments.append((blk_start, nb, n))
        blk_start += nb

    # ---- single fused pallas_call for the objectness BCE of all levels -------
    x2d = jnp.concatenate(obj_x).reshape(-1, 128)
    psums = _obj_softplus_partial_sums(x2d, block_rows)       # (8, nb_total*128)

    obj_losses = []
    for i, (start, nb, n) in enumerate(segments):
        s = jnp.sum(psums[:, start * 128:(start + nb) * 128]) - obj_corr[i]
        obj_losses.append(s / jnp.float32(n) * BALANCE[i])

    # reference only averages over levels that had valid targets (box/cls)
    has = jnp.stack(has_t)
    n_has = jnp.maximum(jnp.sum(has), 1.0)
    lbox = jnp.sum(jnp.stack(box_losses) * has) / n_has * BOX_WEIGHT
    lcls = jnp.sum(jnp.stack(cls_losses) * has) / n_has * CLS_WEIGHT
    lobj = jnp.mean(jnp.stack(obj_losses)) * OBJ_WEIGHT
    loss = lbox + lobj + lcls
    # TODO(synk): the reference's try/except and empty-input early-exit paths
    # (return dummy 0.1 loss) are host-side control flow not represented here.
    return loss, {"box_loss": lbox, "obj_loss": lobj, "cls_loss": lcls}


# ----------------------------- demo ------------------------------------------
if __name__ == "__main__":
    key = jax.random.PRNGKey(0)
    B = 2
    grids = [16, 8, 4]
    preds = []
    for g in grids:
        key, k = jax.random.split(key)
        preds.append(jax.random.normal(k, (B, NA * (5 + NUM_CLASSES), g, g),
                                       jnp.float32))
    # targets: [Nt, 6]; per the reference's actual usage after standardization:
    # col0 = class, col1:3 = grid x,y, col3:5 = w,h, col5 unused.
    Nt = 5
    key, k1, k2, k3 = jax.random.split(key, 4)
    cls = jax.random.randint(k1, (Nt, 1), 0, NUM_CLASSES).astype(jnp.float32)
    xy = jax.random.uniform(k2, (Nt, 2), minval=0.5, maxval=3.5)
    wh = jax.random.uniform(k3, (Nt, 2), minval=0.5, maxval=4.0)
    extra = jnp.ones((Nt, 1), jnp.float32)
    targets = jnp.concatenate([cls, xy, wh, extra], axis=1)

    loss, items = yolo_loss(tuple(preds), targets)
    jax.block_until_ready(loss)
    jax.block_until_ready(items)
    print("KERNEL_OK")
</pallas_src>

<mosaic_0001>
module attributes {stable_mosaic.version = 11 : i64} {
  func.func @_obj_softplus_sum_kernel(%arg0: i32, %arg1: memref<8x128xf32, #tpu.memory_space<vmem>>, %arg2: memref<8x128xf32, #tpu.memory_space<vmem>>) attributes {dimension_semantics = [#tpu.dimension_semantics<parallel>], iteration_bounds = array<i64: 4>, scalar_prefetch = 0 : i64, scratch_operands = 0 : i64, tpu.core_type = #tpu.core_type<tc>, window_params = [{transform_indices = @transform_0, window_bounds = array<i64: 8, 128>}, {transform_indices = @transform_1, window_bounds = array<i64: 8, 128>}]} {
    %c0 = arith.constant 0 : index
    %c0_0 = arith.constant 0 : index
    %0 = vector.load %arg1[%c0, %c0_0] : memref<8x128xf32, #tpu.memory_space<vmem>>, vector<8x128xf32>
    %cst = arith.constant 0.000000e+00 : f32
    %1 = vector.broadcast %cst : f32 to vector<8x128xf32>
    %2 = arith.maximumf %0, %1 : vector<8x128xf32>
    %3 = math.absf %0 : vector<8x128xf32>
    %cst_1 = arith.constant 0.000000e+00 : f32
    %4 = vector.broadcast %cst_1 : f32 to vector<8x128xf32>
    %5 = arith.subf %4, %3 : vector<8x128xf32>
    %6 = math.exp %5 : vector<8x128xf32>
    %7 = math.log1p %6 : vector<8x128xf32>
    %8 = arith.addf %2, %7 : vector<8x128xf32>
    %c0_2 = arith.constant 0 : index
    %c0_3 = arith.constant 0 : index
    %9 = vector.load %arg2[%c0_2, %c0_3] : memref<8x128xf32, #tpu.memory_space<vmem>>, vector<8x128xf32>
    tpu.vector_store %arg2[%c0_2, %c0_3], %8 {strides = array<i32>} : memref<8x128xf32, #tpu.memory_space<vmem>>, vector<8x128xf32>,
    return
  }
  func.func @transform_0(%arg0: i32) -> (i32, i32) {
    %c0_i32 = arith.constant 0 : i32
    %c0_i32_0 = arith.constant 0 : i32
    return %arg0, %c0_i32 : i32, i32
  }
  func.func @transform_1(%arg0: i32) -> (i32, i32) {
    %c0_i32 = arith.constant 0 : i32
    %c0_i32_0 = arith.constant 0 : i32
    return %c0_i32, %arg0 : i32, i32
  }
}

</mosaic_0001>

<llo_original>
// kernel: squeeze.91
$region0: #{squeeze.91}
  %s0 = inlined_call_operand.vmem [shape: f32[2,3,1,16,16], index: 0, kind: input, shape index: {}]
  %s1 = inlined_call_operand.vmem [shape: f32[1536], index: 1, kind: output, shape index: {}]
  %v2 = vld [vmem:[%s0] ss:$8 sm:$0xf]
  %v3 = vld [vmem:[%s0] ss:$8 sm:$0xf0]
  %vm4 = vcmask 1047556
  %v5 = vsel %vm4, %v3, %v2
  %vm6 = vcmask 130048
  %7 = vst.msk [vmem:[%s1] sm:$0xff] %vm6, %v5
  %s8 = scalar_lea.vmem %s0, 64
  %v9 = vld [vmem:[%s8] ss:$8 sm:$0xf]
  %vm10 = vcmask 130048
  %s11 = scalar_lea.vmem %s1, 8
  %12 = vst.msk [vmem:[%s11] sm:$0xf] %vm10, %v9
  %s13 = scalar_lea.vmem %s0, 7
  %v14 = vld [vmem:[%s13] ss:$8 sm:$0xf]
  %s15 = scalar_lea.vmem %s0, 7
  %v16 = vld [vmem:[%s15] ss:$8 sm:$0xf0]
  %vm17 = vcmask 1047556
  %v18 = vsel %vm17, %v16, %v14
  %19 = vrot.lane.b32.xlu0 %v18, 112
  %v20 = vpop.permute.xlu0 %19
  %vm21 = vcmask 1048448
  %22 = vst.msk [vmem:[%s1] sm:$0xff] %vm21, %v20
  %s23 = scalar_lea.vmem %s0, 71
  %v24 = vld [vmem:[%s23] ss:$8 sm:$0xf]
  %25 = vrot.lane.b32.xlu0 %v24, 112
  %v26 = vpop.permute.xlu0 %25
  %vm27 = vcmask 1048448
  %s28 = scalar_lea.vmem %s1, 8
  %29 = vst.msk [vmem:[%s28] sm:$0xf] %vm27, %v26
  %s30 = scalar_lea.vmem %s0, 6
  %v31 = vld [vmem:[%s30] ss:$8 sm:$0xf]
  %s32 = scalar_lea.vmem %s0, 6
  %v33 = vld [vmem:[%s32] ss:$8 sm:$0xf0]
  %vm34 = vcmask 1047556
  %v35 = vsel %vm34, %v33, %v31
  %36 = vrot.lane.b32.xlu0 %v35, 96
  %v37 = vpop.permute.xlu0 %36
  %vm38 = vcmask 917248
  %39 = vst.msk [vmem:[%s1] sm:$0xff] %vm38, %v37
  %s40 = scalar_lea.vmem %s0, 70
  %v41 = vld [vmem:[%s40] ss:$8 sm:$0xf]
  %42 = vrot.lane.b32.xlu0 %v41, 96
  %v43 = vpop.permute.xlu0 %42
  %vm44 = vcmask 917248
  %s45 = scalar_lea.vmem %s1, 8
  %46 = vst.msk [vmem:[%s45] sm:$0xf] %vm44, %v43
  %s47 = scalar_lea.vmem %s0, 5
  %v48 = vld [vmem:[%s47] ss:$8 sm:$0xf]
  %s49 = scalar_lea.vmem %s0, 5
  %v50 = vld [vmem:[%s49] ss:$8 sm:$0xf0]
  %vm51 = vcmask 1047556
  %v52 = vsel %vm51, %v50, %v48
  %53 = vrot.lane.b32.xlu0 %v52, 80
  %v54 = vpop.permute.xlu0 %53
  %vm55 = vcmask 786048
  %56 = vst.msk [vmem:[%s1] sm:$0xff] %vm55, %v54
  %s57 = scalar_lea.vmem %s0, 69
  %v58 = vld [vmem:[%s57] ss:$8 sm:$0xf]
  %59 = vrot.lane.b32.xlu0 %v58, 80
  %v60 = vpop.permute.xlu0 %59
  %vm61 = vcmask 786048
  %s62 = scalar_lea.vmem %s1, 8
  %63 = vst.msk [vmem:[%s62] sm:$0xf] %vm61, %v60
  %s64 = scalar_lea.vmem %s0, 4
  %v65 = vld [vmem:[%s64] ss:$8 sm:$0xf]
  %s66 = scalar_lea.vmem %s0, 4
  %v67 = vld [vmem:[%s66] ss:$8 sm:$0xf0]
  %vm68 = vcmask 1047556
  %v69 = vsel %vm68, %v67, %v65
  %70 = vrot.lane.b32.xlu0 %v69, 64
  %v71 = vpop.permute.xlu0 %70
  %vm72 = vcmask 654848
  %73 = vst.msk [vmem:[%s1] sm:$0xff] %vm72, %v71
  %s74 = scalar_lea.vmem %s0, 68
  %v75 = vld [vmem:[%s74] ss:$8 sm:$0xf]
  %76 = vrot.lane.b32.xlu0 %v75, 64
  %v77 = vpop.permute.xlu0 %76
  %vm78 = vcmask 654848
  %s79 = scalar_lea.vmem %s1, 8
  %80 = vst.msk [vmem:[%s79] sm:$0xf] %vm78, %v77
  %s81 = scalar_lea.vmem %s0, 3
  %v82 = vld [vmem:[%s81] ss:$8 sm:$0xf]
  %s83 = scalar_lea.vmem %s0, 3
  %v84 = vld [vmem:[%s83] ss:$8 sm:$0xf0]
  %vm85 = vcmask 1047556
  %v86 = vsel %vm85, %v84, %v82
  %87 = vrot.lane.b32.xlu0 %v86, 48
  %v88 = vpop.permute.xlu0 %87
  %vm89 = vcmask 523648
  %90 = vst.msk [vmem:[%s1] sm:$0xff] %vm89, %v88
  %s91 = scalar_lea.vmem %s0, 67
  %v92 = vld [vmem:[%s91] ss:$8 sm:$0xf]
  %93 = vrot.lane.b32.xlu0 %v92, 48
  %v94 = vpop.permute.xlu0 %93
  %vm95 = vcmask 523648
  %s96 = scalar_lea.vmem %s1, 8
  %97 = vst.msk [vmem:[%s96] sm:$0xf] %vm95, %v94
  %s98 = scalar_lea.vmem %s0, 2
  %v99 = vld [vmem:[%s98] ss:$8 sm:$0xf]
  %s100 = scalar_lea.vmem %s0, 2
  %v101 = vld [vmem:[%s100] ss:$8 sm:$0xf0]
  %vm102 = vcmask 1047556
  %v103 = vsel %vm102, %v101, %v99
  %104 = vrot.lane.b32.xlu0 %v103, 32
  %v105 = vpop.permute.xlu0 %104
  %vm106 = vcmask 392448
  %107 = vst.msk [vmem:[%s1] sm:$0xff] %vm106, %v105
  %s108 = scalar_lea.vmem %s0, 66
  %v109 = vld [vmem:[%s108] ss:$8 sm:$0xf]
  %110 = vrot.lane.b32.xlu0 %v109, 32
  %v111 = vpop.permute.xlu0 %110
  %vm112 = vcmask 392448
  %s113 = scalar_lea.vmem %s1, 8
  %114 = vst.msk [vmem:[%s113] sm:$0xf] %vm112, %v111
  %s115 = scalar_lea.vmem %s0, 1
  %v116 = vld [vmem:[%s115] ss:$8 sm:$0xf]
  %s117 = scalar_lea.vmem %s0, 1
  %v118 = vld [vmem:[%s117] ss:$8 sm:$0xf0]
  %vm119 = vcmask 1047556
  %v120 = vsel %vm119, %v118, %v116
  %121 = vrot.lane.b32.xlu0 %v120, 16
  %v122 = vpop.permute.xlu0 %121
  %vm123 = vcmask 261248
  %124 = vst.msk [vmem:[%s1] sm:$0xff] %vm123, %v122
  %s125 = scalar_lea.vmem %s0, 65
  %v126 = vld [vmem:[%s125] ss:$8 sm:$0xf]
  %127 = vrot.lane.b32.xlu0 %v126, 16
  %v128 = vpop.permute.xlu0 %127
  %vm129 = vcmask 261248
  %s130 = scalar_lea.vmem %s1, 8
  %131 = vst.msk [vmem:[%s130] sm:$0xf] %vm129, %v128

// kernel: squeeze.114
$region0: #{squeeze.114}
  %s0 = inlined_call_operand.vmem [shape: f32[2,3,1,8,8], index: 0, kind: input, shape index: {}]
  %s1 = inlined_call_operand.vmem [shape: f32[384], index: 1, kind: output, shape index: {}]
  $region1: #{squeeze.114} parent=0
    #allocation0 [shape = 'u8[4096]{0}', space=vmem, size = 0x1000, scoped, tag = 'scoped mem for output reshape']
    %s2 = smov 3
    %v3 = vld [vmem:[%s0] ss:$16 sm:%s2]
    %s4 = scalar_lea.vmem %s0, 30
    %v5 = vld [vmem:[%s4] sm:$0x4]
    %vm6 = vcmask 1042434
    %v7 = vsel %vm6, %v5, %v3
    %vm8 = vcmask 64512
    %9 = vst.msk [vmem:[#allocation0] sm:$0x7] %vm8, %v7
    %s10 = scalar_lea.vmem %s0, 15
    %s11 = smov 3
    %v12 = vld [vmem:[%s10] ss:$16 sm:%s11]
    %s13 = scalar_lea.vmem %s0, 45
    %v14 = vld [vmem:[%s13] sm:$0x4]
    %vm15 = vcmask 1042434
    %v16 = vsel %vm15, %v14, %v12
    %17 = vrot.lane.b32.xlu0 %v16, 120
    %v18 = vpop.permute.xlu0 %17
    %vm19 = vcmask 1048512
    %20 = vst.msk [vmem:[#allocation0] sm:$0x7] %vm19, %v18
    %s21 = scalar_lea.vmem %s0, 14
    %s22 = smov 3
    %v23 = vld [vmem:[%s21] ss:$16 sm:%s22]
    %s24 = scalar_lea.vmem %s0, 44
    %v25 = vld [vmem:[%s24] sm:$0x4]
    %vm26 = vcmask 1042434
    %v27 = vsel %vm26, %v25, %v23
    %28 = vrot.lane.b32.xlu0 %v27, 112
    %v29 = vpop.permute.xlu0 %28
    %vm30 = vcmask 982912
    %31 = vst.msk [vmem:[#allocation0] sm:$0x7] %vm30, %v29
    %s32 = scalar_lea.vmem %s0, 13
    %s33 = smov 3
    %v34 = vld [vmem:[%s32] ss:$16 sm:%s33]
    %s35 = scalar_lea.vmem %s0, 43
    %v36 = vld [vmem:[%s35] sm:$0x4]
    %vm37 = vcmask 1042434
    %v38 = vsel %vm37, %v36, %v34
    %39 = vrot.lane.b32.xlu0 %v38, 104
    %v40 = vpop.permute.xlu0 %39
    %vm41 = vcmask 917312
    %42 = vst.msk [vmem:[#allocation0] sm:$0x7] %vm41, %v40
    %s43 = scalar_lea.vmem %s0, 12
    %s44 = smov 3
    %v45 = vld [vmem:[%s43] ss:$16 sm:%s44]
    %s46 = scalar_lea.vmem %s0, 42
    %v47 = vld [vmem:[%s46] sm:$0x4]
    %vm48 = vcmask 1042434
    %v49 = vsel %vm48, %v47, %v45
    %50 = vrot.lane.b32.xlu0 %v49, 96
    %v51 = vpop.permute.xlu0 %50
    %vm52 = vcmask 851712
    %53 = vst.msk [vmem:[#allocation0] sm:$0x7] %vm52, %v51
    %s54 = scalar_lea.vmem %s0, 11
    %s55 = smov 3
    %v56 = vld [vmem:[%s54] ss:$16 sm:%s55]
    %s57 = scalar_lea.vmem %s0, 41
    %v58 = vld [vmem:[%s57] sm:$0x4]
    %vm59 = vcmask 1042434
    %v60 = vsel %vm59, %v58, %v56
    %61 = vrot.lane.b32.xlu0 %v60, 88
    %v62 = vpop.permute.xlu0 %61
    %vm63 = vcmask 786112
    %64 = vst.msk [vmem:[#allocation0] sm:$0x7] %vm63, %v62
    %s65 = scalar_lea.vmem %s0, 10
    %s66 = smov 3
    %v67 = vld [vmem:[%s65] ss:$16 sm:%s66]
    %s68 = scalar_lea.vmem %s0, 40
    %v69 = vld [vmem:[%s68] sm:$0x4]
    %vm70 = vcmask 1042434
    %v71 = vsel %vm70, %v69, %v67
    %72 = vrot.lane.b32.xlu0 %v71, 80
    %v73 = vpop.permute.xlu0 %72
    %vm74 = vcmask 720512
    %75 = vst.msk [vmem:[#allocation0] sm:$0x7] %vm74, %v73
    %s76 = scalar_lea.vmem %s0, 9
    %s77 = smov 3
    %v78 = vld [vmem:[%s76] ss:$16 sm:%s77]
    %s79 = scalar_lea.vmem %s0, 39
    %v80 = vld [vmem:[%s79] sm:$0x4]
    %vm81 = vcmask 1042434
    %v82 = vsel %vm81, %v80, %v78
    %83 = vrot.lane.b32.xlu0 %v82, 72
    %v84 = vpop.permute.xlu0 %83
    %vm85 = vcmask 654912
    %86 = vst.msk [vmem:[#allocation0] sm:$0x7] %vm85, %v84
    %s87 = scalar_lea.vmem %s0, 8
    %s88 = smov 3
    %v89 = vld [vmem:[%s87] ss:$16 sm:%s88]
    %s90 = scalar_lea.vmem %s0, 38
    %v91 = vld [vmem:[%s90] sm:$0x4]
    %vm92 = vcmask 1042434
    %v93 = vsel %vm92, %v91, %v89
    %94 = vrot.lane.b32.xlu0 %v93, 64
    %v95 = vpop.permute.xlu0 %94
    %vm96 = vcmask 589312
    %97 = vst.msk [vmem:[#allocation0] sm:$0x7] %vm96, %v95
    %s98 = scalar_lea.vmem %s0, 7
    %s99 = smov 3
    %v100 = vld [vmem:[%s98] ss:$16 sm:%s99]
    %s101 = scalar_lea.vmem %s0, 37
    %v102 = vld [vmem:[%s101] sm:$0x4]
    %vm103 = vcmask 1042434
    %v104 = vsel %vm103, %v102, %v100
    %105 = vrot.lane.b32.xlu0 %v104, 56
    %v106 = vpop.permute.xlu0 %105
    %vm107 = vcmask 523712
    %108 = vst.msk [vmem:[#allocation0] sm:$0x7] %vm107, %v106
    %s109 = scalar_lea.vmem %s0, 6
    %s110 = smov 3
    %v111 = vld [vmem:[%s109] ss:$16 sm:%s110]
    %s112 = scalar_lea.vmem %s0, 36
    %v113 = vld [vmem:[%s112] sm:$0x4]
    %vm114 = vcmask 1042434
    %v115 = vsel %vm114, %v113, %v111
    %116 = vrot.lane.b32.xlu0 %v115, 48
    %v117 = vpop.permute.xlu0 %116
    %vm118 = vcmask 458112
    %119 = vst.msk [vmem:[#allocation0] sm:$0x7] %vm118, %v117
    %s120 = scalar_lea.vmem %s0, 5
    %s121 = smov 3
    %v122 = vld [vmem:[%s120] ss:$16 sm:%s121]
    %s123 = scalar_lea.vmem %s0, 35
    %v124 = vld [vmem:[%s123] sm:$0x4]
    %vm125 = vcmask 1042434
    %v126 = vsel %vm125, %v124, %v122
    %127 = vrot.lane.b32.xlu0 %v126, 40
    %v128 = vpop.permute.xlu0 %127
    %vm129 = vcmask 392512
    %130 = vst.msk [vmem:[#allocation0] sm:$0x7] %vm129, %v128
    %s131 = scalar_lea.vmem %s0, 4
    %s132 = smov 3
    %v133 = vld [vmem:[%s131] ss:$16 sm:%s132]
    %s134 = scalar_lea.vmem %s0, 34
    %v135 = vld [vmem:[%s134] sm:$0x4]
    %vm136 = vcmask 1042434
    %v137 = vsel %vm136, %v135, %v133
    %138 = vrot.lane.b32.xlu0 %v137, 32
    %v139 = vpop.permute.xlu0 %138
    %vm140 = vcmask 326912
    %141 = vst.msk [vmem:[#allocation0] sm:$0x7] %vm140, %v139
    %s142 = scalar_lea.vmem %s0, 3
    %s143 = smov 3
    %v144 = vld [vmem:[%s142] ss:$16 sm:%s143]
    %s145 = scalar_lea.vmem %s0, 33
    %v146 = vld [vmem:[%s145] sm:$0x4]
    %vm147 = vcmask 1042434
    %v148 = vsel %vm147, %v146, %v144
    %149 = vrot.lane.b32.xlu0 %v148, 24
    %v150 = vpop.permute.xlu0 %149
    %vm151 = vcmask 261312
    %152 = vst.msk [vmem:[#allocation0] sm:$0x7] %vm151, %v150
    %s153 = scalar_lea.vmem %s0, 2
    %s154 = smov 3
    %v155 = vld [vmem:[%s153] ss:$16 sm:%s154]
    %s156 = scalar_lea.vmem %s0, 32
    %v157 = vld [vmem:[%s156] sm:$0x4]
    %vm158 = vcmask 1042434
    %v159 = vsel %vm158, %v157, %v155
    %160 = vrot.lane.b32.xlu0 %v159, 16
    %v161 = vpop.permute.xlu0 %160
    %vm162 = vcmask 195712
    %163 = vst.msk [vmem:[#allocation0] sm:$0x7] %vm162, %v161
    %s164 = scalar_lea.vmem %s0, 1
    %s165 = smov 3
    %v166 = vld [vmem:[%s164] ss:$16 sm:%s165]
    %s167 = scalar_lea.vmem %s0, 31
    %v168 = vld [vmem:[%s167] sm:$0x4]
    %vm169 = vcmask 1042434
    %v170 = vsel %vm169, %v168, %v166
    %171 = vrot.lane.b32.xlu0 %v170, 8
    %v172 = vpop.permute.xlu0 %171
    %vm173 = vcmask 130112
    %174 = vst.msk [vmem:[#allocation0] sm:$0x7] %vm173, %v172
    %s176 = sshllo.u32 0, 4
    %v178 = vld [vmem:[#allocation0] sm:%s176]
    %s179 = sshllo.u32 0, 4
    %180 = vst [vmem:[%s1] sm:%s179] %v178

// kernel: squeeze.137
$region0: #{squeeze.137}
  %s0 = inlined_call_operand.vmem [shape: f32[2,3,1,4,4], index: 0, kind: input, shape index: {}]
  %s1 = inlined_call_operand.vmem [shape: f32[96], index: 1, kind: output, shape index: {}]
  $region1: #{squeeze.137} parent=0
    #allocation0 [shape = 'u8[4096]{0}', space=vmem, size = 0x1000, scoped, tag = 'scoped mem for output reshape']
    #allocation1 [shape = 'u8[24576]{0}', space=vmem, size = 0x6000, scoped, tag = 'scoped mem for input reshape']
    %s3 = sshllo.u32 0, 4
    %s4 = smul.addr 4, 5
    %s5 = scalar_lea.vmem %s0, %s4
    %v6 = vld [vmem:[%s5] sm:%s3]
    %s7 = scalar_lea.vmem [#allocation1], 40
    %8 = vst [vmem:[%s7] sm:%s3] %v6
    %s9 = smul.addr 4, 4
    %s10 = scalar_lea.vmem %s0, %s9
    %v11 = vld [vmem:[%s10] sm:%s3]
    %s12 = scalar_lea.vmem [#allocation1], 32
    %13 = vst [vmem:[%s12] sm:%s3] %v11
    %s14 = smul.addr 4, 3
    %s15 = scalar_lea.vmem %s0, %s14
    %v16 = vld [vmem:[%s15] sm:%s3]
    %s17 = scalar_lea.vmem [#allocation1], 24
    %18 = vst [vmem:[%s17] sm:%s3] %v16
    %s19 = smul.addr 4, 2
    %s20 = scalar_lea.vmem %s0, %s19
    %v21 = vld [vmem:[%s20] sm:%s3]
    %s22 = scalar_lea.vmem [#allocation1], 16
    %23 = vst [vmem:[%s22] sm:%s3] %v21
    %s24 = scalar_lea.vmem %s0, 4
    %v25 = vld [vmem:[%s24] sm:%s3]
    %s26 = scalar_lea.vmem [#allocation1], 8
    %27 = vst [vmem:[%s26] sm:%s3] %v25
    %v28 = vld [vmem:[%s0] sm:%s3]
    %29 = vst [vmem:[#allocation1] sm:%s3] %v28
    %v30 = vld [vmem:[#allocation1] sm:$0x1]
    %vm31 = vcmask 31744
    %32 = vst.msk [vmem:[#allocation0] sm:$0x1] %vm31, %v30
    %s33 = scalar_lea.vmem [#allocation1], 43
    %v34 = vld [vmem:[%s33] sm:$0x1]
    %35 = vrot.lane.b32.xlu0 %v34, 92
    %v36 = vpop.permute.xlu0 %35
    %vm37 = vcmask 786144
    %38 = vst.msk [vmem:[#allocation0] sm:$0x1] %vm37, %v36
    %s39 = scalar_lea.vmem [#allocation1], 42
    %v40 = vld [vmem:[%s39] sm:$0x1]
    %41 = vrot.lane.b32.xlu0 %v40, 88
    %v42 = vpop.permute.xlu0 %41
    %vm43 = vcmask 753344
    %44 = vst.msk [vmem:[#allocation0] sm:$0x1] %vm43, %v42
    %s45 = scalar_lea.vmem [#allocation1], 41
    %v46 = vld [vmem:[%s45] sm:$0x1]
    %47 = vrot.lane.b32.xlu0 %v46, 84
    %v48 = vpop.permute.xlu0 %47
    %vm49 = vcmask 720544
    %50 = vst.msk [vmem:[#allocation0] sm:$0x1] %vm49, %v48
    %s51 = scalar_lea.vmem [#allocation1], 40
    %v52 = vld [vmem:[%s51] sm:$0x1]
    %53 = vrot.lane.b32.xlu0 %v52, 80
    %v54 = vpop.permute.xlu0 %53
    %vm55 = vcmask 687744
    %56 = vst.msk [vmem:[#allocation0] sm:$0x1] %vm55, %v54
    %s57 = scalar_lea.vmem [#allocation1], 35
    %v58 = vld [vmem:[%s57] sm:$0x1]
    %59 = vrot.lane.b32.xlu0 %v58, 76
    %v60 = vpop.permute.xlu0 %59
    %vm61 = vcmask 654944
    %62 = vst.msk [vmem:[#allocation0] sm:$0x1] %vm61, %v60
    %s63 = scalar_lea.vmem [#allocation1], 34
    %v64 = vld [vmem:[%s63] sm:$0x1]
    %65 = vrot.lane.b32.xlu0 %v64, 72
    %v66 = vpop.permute.xlu0 %65
    %vm67 = vcmask 622144
    %68 = vst.msk [vmem:[#allocation0] sm:$0x1] %vm67, %v66
    %s69 = scalar_lea.vmem [#allocation1], 33
    %v70 = vld [vmem:[%s69] sm:$0x1]
    %71 = vrot.lane.b32.xlu0 %v70, 68
    %v72 = vpop.permute.xlu0 %71
    %vm73 = vcmask 589344
    %74 = vst.msk [vmem:[#allocation0] sm:$0x1] %vm73, %v72
    %s75 = scalar_lea.vmem [#allocation1], 32
    %v76 = vld [vmem:[%s75] sm:$0x1]
    %77 = vrot.lane.b32.xlu0 %v76, 64
    %v78 = vpop.permute.xlu0 %77
    %vm79 = vcmask 556544
    %80 = vst.msk [vmem:[#allocation0] sm:$0x1] %vm79, %v78
    %s81 = scalar_lea.vmem [#allocation1], 27
    %v82 = vld [vmem:[%s81] sm:$0x1]
    %83 = vrot.lane.b32.xlu0 %v82, 60
    %v84 = vpop.permute.xlu0 %83
    %vm85 = vcmask 523744
    %86 = vst.msk [vmem:[#allocation0] sm:$0x1] %vm85, %v84
    %s87 = scalar_lea.vmem [#allocation1], 26
    %v88 = vld [vmem:[%s87] sm:$0x1]
    %89 = vrot.lane.b32.xlu0 %v88, 56
    %v90 = vpop.permute.xlu0 %89
    %vm91 = vcmask 490944
    %92 = vst.msk [vmem:[#allocation0] sm:$0x1] %vm91, %v90
    %s93 = scalar_lea.vmem [#allocation1], 25
    %v94 = vld [vmem:[%s93] sm:$0x1]
    %95 = vrot.lane.b32.xlu0 %v94, 52
    %v96 = vpop.permute.xlu0 %95
    %vm97 = vcmask 458144
    %98 = vst.msk [vmem:[#allocation0] sm:$0x1] %vm97, %v96
    %s99 = scalar_lea.vmem [#allocation1], 24
    %v100 = vld [vmem:[%s99] sm:$0x1]
    %101 = vrot.lane.b32.xlu0 %v100, 48
    %v102 = vpop.permute.xlu0 %101
    %vm103 = vcmask 425344
    %104 = vst.msk [vmem:[#allocation0] sm:$0x1] %vm103, %v102
    %s105 = scalar_lea.vmem [#allocation1], 19
    %v106 = vld [vmem:[%s105] sm:$0x1]
    %107 = vrot.lane.b32.xlu0 %v106, 44
    %v108 = vpop.permute.xlu0 %107
    %vm109 = vcmask 392544
    %110 = vst.msk [vmem:[#allocation0] sm:$0x1] %vm109, %v108
    %s111 = scalar_lea.vmem [#allocation1], 18
    %v112 = vld [vmem:[%s111] sm:$0x1]
    %113 = vrot.lane.b32.xlu0 %v112, 40
    %v114 = vpop.permute.xlu0 %113
    %vm115 = vcmask 359744
    %116 = vst.msk [vmem:[#allocation0] sm:$0x1] %vm115, %v114
    %s117 = scalar_lea.vmem [#allocation1], 17
    %v118 = vld [vmem:[%s117] sm:$0x1]
    %119 = vrot.lane.b32.xlu0 %v118, 36
    %v120 = vpop.permute.xlu0 %119
    %vm121 = vcmask 326944
    %122 = vst.msk [vmem:[#allocation0] sm:$0x1] %vm121, %v120
    %s123 = scalar_lea.vmem [#allocation1], 16
    %v124 = vld [vmem:[%s123] sm:$0x1]
    %125 = vrot.lane.b32.xlu0 %v124, 32
    %v126 = vpop.permute.xlu0 %125
    %vm127 = vcmask 294144
    %128 = vst.msk [vmem:[#allocation0] sm:$0x1] %vm127, %v126
    %s129 = scalar_lea.vmem [#allocation1], 11
    %v130 = vld [vmem:[%s129] sm:$0x1]
    %131 = vrot.lane.b32.xlu0 %v130, 28
    %v132 = vpop.permute.xlu0 %131
    %vm133 = vcmask 261344
    %134 = vst.msk [vmem:[#allocation0] sm:$0x1] %vm133, %v132
    %s135 = scalar_lea.vmem [#allocation1], 10
    %v136 = vld [vmem:[%s135] sm:$0x1]
    %137 = vrot.lane.b32.xlu0 %v136, 24
    %v138 = vpop.permute.xlu0 %137
    %vm139 = vcmask 228544
    %140 = vst.msk [vmem:[#allocation0] sm:$0x1] %vm139, %v138
    %s141 = scalar_lea.vmem [#allocation1], 9
    %v142 = vld [vmem:[%s141] sm:$0x1]
    %143 = vrot.lane.b32.xlu0 %v142, 20
    %v144 = vpop.permute.xlu0 %143
    %vm145 = vcmask 195744
    %146 = vst.msk [vmem:[#allocation0] sm:$0x1] %vm145, %v144
    %s147 = scalar_lea.vmem [#allocation1], 8
    %v148 = vld [vmem:[%s147] sm:$0x1]
    %149 = vrot.lane.b32.xlu0 %v148, 16
    %v150 = vpop.permute.xlu0 %149
    %vm151 = vcmask 162944
    %152 = vst.msk [vmem:[#allocation0] sm:$0x1] %vm151, %v150
    %s153 = scalar_lea.vmem [#allocation1], 3
    %v154 = vld [vmem:[%s153] sm:$0x1]
    %155 = vrot.lane.b32.xlu0 %v154, 12
    %v156 = vpop.permute.xlu0 %155
    %vm157 = vcmask 130144
    %158 = vst.msk [vmem:[#allocation0] sm:$0x1] %vm157, %v156
    %s159 = scalar_lea.vmem [#allocation1], 2
    %v160 = vld [vmem:[%s159] sm:$0x1]
    %161 = vrot.lane.b32.xlu0 %v160, 8
    %v162 = vpop.permute.xlu0 %161
    %vm163 = vcmask 97344
    %164 = vst.msk [vmem:[#allocation0] sm:$0x1] %vm163, %v162
    %s165 = scalar_lea.vmem [#allocation1], 1
    %v166 = vld [vmem:[%s165] sm:$0x1]
    %167 = vrot.lane.b32.xlu0 %v166, 4
    %v168 = vpop.permute.xlu0 %167
    %vm169 = vcmask 64544
    %170 = vst.msk [vmem:[#allocation0] sm:$0x1] %vm169, %v168
    %s172 = sshllo.u32 0, 1
    %v174 = vld [vmem:[#allocation0] sm:%s172]
    %s175 = sshllo.u32 0, 1
    %176 = vst [vmem:[%s1] sm:%s175] %v174

// kernel: yolo_loss.1
$region0: #{yolo_loss.1}
  #allocation0 [shape = 'u32[]', space=smem, size = 0x4, offset = 0x4, fixed_abs, tag = 'smem constant byte address 0x4 - core index']
  #allocation1 [shape = 'u32[144,128]{1,0:T(1,128)}', space=vmem, size = 0x12000, scoped, tag = 'internal scratch']
  %s0 = inlined_call_operand.vmem [shape: f32[32,128], index: 0, kind: input, shape index: {}]
  %s1 = inlined_call_operand.vmem [shape: f32[8,512], index: 1, kind: output, shape index: {}]
  %s2 = sld [smem:[#allocation0]]
  $region37: #{yolo_loss.1} parent=0
    _
  %s4 = ssub.s32 1, %s2
  %s5 = scalar_select 0, %s4, %s2
  loop: start=0, step=1, limit=6
  $region2: #{yolo_loss.1} parent=0 // loop_pre_header
    _
  $region3: #{yolo_loss.1} parent=0 // loop_header
    %s7 = sphi 0, %s11
    %p8 = scmp.ge.s32.totalorder %s7, 6
    %s17 = sphi 0, %s19
    %s20 = sphi 0, %s17
    %s21 = sphi 0, %s20
    %s37 = sphi 0, %s21
    %s43 = sphi 0, %s45
    %s46 = sphi 0, %s43
    %s47 = sphi 0, %s46
    %s63 = sphi 0, %s47
  $region4: #{yolo_loss.1} parent=0 // loop_header_branch
    %10 = sbr.rel (%p8) target = $region8
  $region5: #{yolo_loss.1} parent=0 // loop_body
    %s12 = ssub.s32 %s7, 1
    %s13 = ssub.s32 %s7, 2
    %s14 = sadd.s32 %s7, 1
    %s15 = ssub.s32 %s7, %s14
    %p16 = scmp.eq.s32.totalorder %s15, 0
    %s18 = sadd.s32 %s17, 1
    %s19 = scalar_select %p16, %s17, %s18
    %p22 = pneg %p16
    %p23 = scmp.eq.s32.totalorder %s7, 3
    %p24 = por %p22, %p23
    %p25 = scmp.ne.s32.totalorder %s17, %s20
    %p26 = scmp.eq.s32.totalorder %s7, 0
    %p27 = por %p25, %p26
    %p28 = scmp.ne.s32.totalorder %s17, %s20
    %p29 = scmp.eq.s32.totalorder %s12, 3
    %p30 = por %p28, %p29
    %p31 = scmp.ne.s32.totalorder %s20, %s21
    %p32 = scmp.eq.s32.totalorder %s12, 0
    %p33 = por %p31, %p32
    %p34 = scmp.ne.s32.totalorder %s20, %s21
    %p35 = scmp.eq.s32.totalorder %s13, 3
    %p36 = por %p34, %p35
    %p38 = scmp.ne.s32.totalorder %s21, %s37
    %p39 = scmp.eq.s32.totalorder %s13, 0
    %p40 = por %p38, %p39
    %s41 = ssub.s32 %s7, %s14
    %p42 = scmp.eq.s32.totalorder %s41, 0
    %s44 = sadd.s32 %s43, 1
    %s45 = scalar_select %p42, %s43, %s44
    %p48 = pneg %p42
    %p49 = scmp.eq.s32.totalorder %s7, 3
    %p50 = por %p48, %p49
    %p51 = scmp.ne.s32.totalorder %s43, %s46
    %p52 = scmp.eq.s32.totalorder %s7, 0
    %p53 = por %p51, %p52
    %p54 = scmp.ne.s32.totalorder %s43, %s46
    %p55 = scmp.eq.s32.totalorder %s12, 3
    %p56 = por %p54, %p55
    %p57 = scmp.ne.s32.totalorder %s46, %s47
    %p58 = scmp.eq.s32.totalorder %s12, 0
    %p59 = por %p57, %p58
    %p60 = scmp.ne.s32.totalorder %s46, %s47
    %p61 = scmp.eq.s32.totalorder %s13, 3
    %p62 = por %p60, %p61
    %p64 = scmp.ne.s32.totalorder %s47, %s63
    %p65 = scmp.eq.s32.totalorder %s13, 0
    %p66 = por %p64, %p65
    %p67 = scmp.le.s32.totalorder 1, %s7
    %p68 = scmp.lt.s32.totalorder %s7, 5
    %p69 = pnand %p67, %p68
    %p70 = pneg %p69
    // Predicated region
    $region9: #{yolo_loss.1} parent=5 // pred_check
      _
    $region10: #{yolo_loss.1} parent=5 // pred_check_branch
      %72 = sbr.rel (%p69) target = $region12
    $region11: #{yolo_loss.1} parent=5 // pred_region
      %s73 = ssub.s32 %s7, 1
    $region12: #{yolo_loss.1} parent=5 // pred_fallthru
      _
    %p74 = scmp.lt.s32.totalorder %s7, 4
    // Predicated region
    $region13: #{yolo_loss.1} parent=5 // pred_check
      %p75 = pneg %p74
    $region14: #{yolo_loss.1} parent=5 // pred_check_branch
      %77 = sbr.rel (%p75) target = $region16
    $region15: #{yolo_loss.1} parent=5 // pred_region
      // Predicated region
      $region17: #{yolo_loss.1} parent=15 // pred_check
        %p78 = pneg %p27
      $region18: #{yolo_loss.1} parent=15 // pred_check_branch
        %80 = sbr.rel (%p78) target = $region20
      $region19: #{yolo_loss.1} parent=15 // pred_region
        %p81 = scmp.lt.s32.totalorder %s7, 3
        %s82 = scalar_select %p81, %s7, 3
        %s83 = smul.addr %s82, 8
        %s84 = scalar_lea.vmem %s0, %s83
      $region20: #{yolo_loss.1} parent=15 // pred_fallthru
        _
    $region16: #{yolo_loss.1} parent=5 // pred_fallthru
      _
    %p85 = scmp.le.s32.totalorder 1, %s7
    %p86 = scmp.lt.s32.totalorder %s7, 5
    %p87 = pnand %p85, %p86
    %p88 = pneg %p87
    // Predicated region
    $region21: #{yolo_loss.1} parent=5 // pred_check
      _
    $region22: #{yolo_loss.1} parent=5 // pred_check_branch
      %90 = sbr.rel (%p87) target = $region24
    $region23: #{yolo_loss.1} parent=5 // pred_region
      %s91 = ssub.s32 %s7, 1
      %p92 = scmp.lt.s32.totalorder %s12, 3
      %s93 = scalar_select %p92, %s12, 3
      %s94 = smul.addr %s93, 8
      %s95 = scalar_lea.vmem %s0, %s94
      %p96 = pneg %p33
      %p97 = pneg %p30
      %p98 = pneg %p59
      %p99 = pneg %p56
      %p100 = scmp.lt.s32.totalorder %s12, 3
      %s101 = scalar_select %p100, %s12, 3
      %s102 = smul.addr %s101, 8
      %s103 = scalar_lea.vmem %s1, %s102
      %p104 = scmp.lt.s32.totalorder %s12, 3
      %s105 = scalar_select %p104, %s12, 3
      %s106 = smul.addr %s105, 8
      %s107 = scalar_lea.vmem %s0, %s106
      %p108 = scmp.lt.s32.totalorder %s12, 3
      %s109 = scalar_select %p108, %s12, 3
      %s110 = smul.addr %s109, 8
      %s111 = scalar_lea.vmem %s1, %s110
      %v112 = vld [vmem:[%s107] sm:$0xff]
      %v113 = vmax.f32 %v112, 0.0
      %v114 = vand.u32 2147483647, %v112
      %v115 = vsub.f32 0.0, %v114
      %v116 = vmul.f32 %v115, 1.442695
      %v117 = vpow.pop %v116
      %v118 = vadd.f32 %v117, 1.0
      %v119 = vlog2.pop %v118
      %v120 = vmul.f32 %v119, 0.6931472
      %v121 = vmul.f32 -0.5, %v117
      %v122 = vadd.f32 %v121, 1.0
      %v123 = vmul.f32 %v122, %v117
      %v124 = vand.u32 2147483647, %v117
      %vm125 = vcmp.lt.f32.partialorder %v124, 0.0004427343
      %v126 = vsel %vm125, %v123, %v120
      %v127 = vadd.f32 %v113, %v126
      %128 = vst [vmem:[%s111] sm:$0xff] %v127
      %p129 = scmp.lt.s32.totalorder %s12, 3
      %s130 = scalar_select %p129, %s12, 3
      %s131 = smul.addr %s130, 8
      %s132 = scalar_lea.vmem %s1, %s131
      // Predicated region
      $region25: #{yolo_loss.1} parent=23 // pred_check
        %p133 = pneg %p56
      $region26: #{yolo_loss.1} parent=23 // pred_check_branch
        %135 = sbr.rel (%p133) target = $region28
      $region27: #{yolo_loss.1} parent=23 // pred_region
        _
      $region28: #{yolo_loss.1} parent=23 // pred_fallthru
        _
    $region24: #{yolo_loss.1} parent=5 // pred_fallthru
      _
    %p136 = scmp.le.s32.totalorder 2, %s7
    // Predicated region
    $region29: #{yolo_loss.1} parent=5 // pred_check
      %p137 = pneg %p136
    $region30: #{yolo_loss.1} parent=5 // pred_check_branch
      %139 = sbr.rel (%p137) target = $region32
    $region31: #{yolo_loss.1} parent=5 // pred_region
      %s140 = ssub.s32 %s7, 2
      // Predicated region
      $region33: #{yolo_loss.1} parent=31 // pred_check
        %p141 = pneg %p62
      $region34: #{yolo_loss.1} parent=31 // pred_check_branch
        %143 = sbr.rel (%p141) target = $region36
      $region35: #{yolo_loss.1} parent=31 // pred_region
        %p144 = scmp.lt.s32.totalorder %s13, 3
        %s145 = scalar_select %p144, %s13, 3
        %s146 = smul.addr %s145, 8
        %s147 = scalar_lea.vmem %s1, %s146
      $region36: #{yolo_loss.1} parent=31 // pred_fallthru
        _
    $region32: #{yolo_loss.1} parent=5 // pred_fallthru
      _
  $region6: #{yolo_loss.1} parent=0 // loop_footer
    %s11 = sadd.s32 1, %s7
  $region7: #{yolo_loss.1} parent=0 // loop_footer_branch
    %6 = sbr.rel target = $region3
  $region8: #{yolo_loss.1} parent=0 // loop_exit
    _

</llo_original>
